<compile_context>
chip_gen: v7x
topology: tpu7x:2x2x1
jax: 0.10.0
libtpu: 0.0.40
codegen_flags: <defaults>
</compile_context>

<pallas_src>
import functools

import jax
import jax.numpy as jnp
from jax import lax
from jax.experimental import pallas as pl
from jax.experimental.pallas import tpu as pltpu

_LANE = 128
# Below this element count a fused XLA reduce beats kernel launch + per-step overhead.
_PALLAS_MIN_ELEMENTS = 1 << 16


def _cdiv(a: int, b: int) -> int:
    return -(-a // b)


def _reference_loss(prediction, target):
    """Pure-JAX BCEWithLogits mean loss (also used as the small-input fast path)."""
    x = prediction.astype(jnp.float32)
    y = target.astype(jnp.float32)
    return jnp.mean(jnp.maximum(x, 0.0) - x * y + jnp.log1p(jnp.exp(-jnp.abs(x))))


def _default_block_rows() -> int:
    # 1024 rows x 512 lanes f32 = 2 MiB/input tile: 2 inputs x 2 pipeline
    # buffers ~ 8 MiB, safe under v5e's 16 MiB default scoped-VMEM budget.
    # On v6e/v7x (32 MiB default budget, faster HBM) double the tile to
    # amortize the ~0.35 us fixed per-step cost.
    try:
        kind = jax.devices()[0].device_kind.lower()
    except Exception:  # pragma: no cover - defensive
        return 1024
    if any(tag in kind for tag in ("v2", "v3", "v4", "v5")):
        return 1024
    return 2048


def _bce_mean_kernel(pred_ref, tgt_ref, out_ref, acc_ref, *,
                     tm, acc_rows, rows_valid, tiles_per_core, inv_total):
    p = pl.program_id(0)           # parallel (per-core) axis
    t = pl.program_id(1)           # reduction axis (row tiles owned by this core)
    lt = p * tiles_per_core + t    # logical row-tile index (may exceed the valid range)

    @pl.when(t == 0)
    def _init():
        acc_ref[...] = jnp.zeros_like(acc_ref)

    x = pred_ref[...].astype(jnp.float32)
    y = tgt_ref[...].astype(jnp.float32)
    # Numerically-stable BCEWithLogits (same formulation PyTorch uses).
    elem = jnp.maximum(x, 0.0) - x * y + jnp.log1p(jnp.exp(-jnp.abs(x)))

    groups = tm // acc_rows

    def _accumulate(e):
        # Fold the (tm, lanes) tile onto the small (acc_rows, lanes) accumulator
        # with pure VPU vreg adds (the reshape only splits the sublane axis).
        if groups > 1:
            e = e.reshape(groups, acc_rows, e.shape[-1]).sum(axis=0)
        acc_ref[...] += e

    # Mask only tiles that actually contain invalid rows (ragged tail / the
    # clamped duplicate tile of an odd parallel split).
    tile_fully_valid = (lt + 1) * tm <= rows_valid

    @pl.when(tile_fully_valid)
    def _full():
        _accumulate(elem)

    @pl.when(jnp.logical_not(tile_fully_valid))
    def _masked():
        row = lt * tm + lax.broadcasted_iota(jnp.int32, elem.shape, 0)
        _accumulate(jnp.where(row < rows_valid, elem, 0.0))

    @pl.when(t == tiles_per_core - 1)
    def _finalize():
        # Single cross-lane/sublane reduce, 1/N scale, one resident-block store.
        total = jnp.sum(acc_ref[...]) * inv_total
        out_ref[...] = jnp.zeros_like(out_ref) + total


def complex_initial_pair_loss(
    prediction: jax.Array,
    target: jax.Array,
    *,
    block_rows: int | None = None,
    lane_target: int = 512,
    force_pallas: bool = False,
) -> jax.Array:
    """BCEWithLogitsLoss(prediction, target), mean reduction, computed in Pallas."""
    assert prediction.shape == target.shape, "prediction/target must match shapes"
    n_total = int(prediction.size)
    assert n_total > 0, "empty input"

    if not force_pallas and n_total < _PALLAS_MIN_ELEMENTS:
        # Tiny inputs (e.g. the literal (8,128) production shape): a fused XLA
        # reduce beats the pallas_call launch + per-step overhead.
        return _reference_loss(prediction, target)

    # ---- Build a COPY-FREE lane-oriented 2-D view (rows, lanes). ----
    lanes = None
    cap = max(_LANE, (lane_target // _LANE) * _LANE)
    for cand in range(cap, 0, -_LANE):  # try 512, 384, 256, 128
        if n_total % cand == 0:
            lanes = cand
            break
    if lanes is not None:
        rows = n_total // lanes                       # exact, lane-dense view
    elif prediction.ndim >= 2:
        lanes = prediction.shape[-1]                  # full last dim (copy-free)
        rows = n_total // lanes
    else:
        # Pathological: 1-D input whose length is not a multiple of 128.
        # Lane-sparse but copy-free and correct.
        lanes = 1
        rows = n_total
    pred2d = prediction.reshape(rows, lanes)          # row-major reshape: bitcast, no HBM copy
    tgt2d = target.reshape(rows, lanes)

    # ---- Tiling. ----
    if block_rows is None:
        block_rows = _default_block_rows()
    if rows <= block_rows:
        tm = rows                                     # full-extent sublane block (always legal)
    else:
        tm = max(8, (block_rows // 8) * 8)            # multiple of 8

    acc_rows = tm
    for d in (64, 32, 16, 8):                         # small accumulator with summation headroom
        if tm % d == 0:
            acc_rows = d
            break

    tiles_total = _cdiv(rows, tm)
    n_cores = 2 if tiles_total >= 2 else 1            # shard the reduction across TCs on v7x
    tiles_per_core = _cdiv(tiles_total, n_cores)
    grid = (n_cores, tiles_per_core)
    last_tile = tiles_total - 1

    def in_index_map(p, t):
        lt = p * tiles_per_core + t
        # Clamp so the DMA never targets an out-of-range block (odd tile count
        # with the 2-core split); the kernel's row mask zeroes its contribution.
        return (jnp.minimum(lt, last_tile), 0)

    kernel = functools.partial(
        _bce_mean_kernel,
        tm=tm, acc_rows=acc_rows, rows_valid=rows,
        tiles_per_core=tiles_per_core, inv_total=1.0 / n_total)

    partials = pl.pallas_call(
        kernel,
        # One (8,128)-aligned partial block per core (avoids sub-tile output blocks).
        out_shape=jax.ShapeDtypeStruct((n_cores, 8, _LANE), jnp.float32),
        grid_spec=pltpu.PrefetchScalarGridSpec(
            num_scalar_prefetch=0,
            grid=grid,
            in_specs=[
                pl.BlockSpec((tm, lanes), in_index_map),
                pl.BlockSpec((tm, lanes), in_index_map),
            ],
            # Per-core output block is constant along the reduction axis, so it
            # stays resident in VMEM and is written back once per core.
            out_specs=pl.BlockSpec((1, 8, _LANE), lambda p, t: (p, 0, 0)),
            scratch_shapes=[pltpu.VMEM((acc_rows, lanes), jnp.float32)],
        ),
        compiler_params=pltpu.CompilerParams(
            dimension_semantics=("parallel", "arbitrary"),
        ),
    )(pred2d, tgt2d)

    # Each core's partial was already scaled by 1/N; sum the per-core scalars.
    return jnp.sum(partials[:, 0, 0])


if __name__ == "__main__":
    key = jax.random.PRNGKey(0)
    k1, k2, k3, k4, k5, k6 = jax.random.split(key, 6)

    # (1) Production-like pairwise-ranking shape, forced through the kernel.
    pred_a = jax.random.normal(k1, (8, 128), dtype=jnp.float32)
    tgt_a = jax.random.bernoulli(k2, 0.5, (8, 128)).astype(jnp.float32)

    # (2) Ragged shape (500 elements, not a multiple of 128): copy-free
    #     full-last-dim view, no padding.
    pred_b = jax.random.normal(k3, (5, 100), dtype=jnp.float32)
    tgt_b = jax.random.bernoulli(k4, 0.5, (5, 100)).astype(jnp.float32)

    # (3) Multi-tile shape exercising the 2-core parallel split, the clamped
    #     extra tile, the in-kernel row mask and bf16 streaming.
    pred_c = jax.random.normal(k5, (625, 512), dtype=jnp.bfloat16)
    tgt_c = jax.random.bernoulli(k6, 0.5, (625, 512)).astype(jnp.float32)

    loss_a = complex_initial_pair_loss(pred_a, tgt_a, force_pallas=True)
    loss_b = complex_initial_pair_loss(pred_b, tgt_b, force_pallas=True)
    loss_c = complex_initial_pair_loss(pred_c, tgt_c, force_pallas=True, block_rows=128)
    loss_d = complex_initial_pair_loss(pred_a, tgt_a)  # auto path -> tiny-input XLA fallback
    jax.block_until_ready((loss_a, loss_b, loss_c, loss_d))

    ref_a = _reference_loss(pred_a, tgt_a)
    ref_b = _reference_loss(pred_b, tgt_b)
    ref_c = _reference_loss(pred_c, tgt_c)

    assert jnp.allclose(loss_a, ref_a, rtol=1e-5, atol=1e-6), (loss_a, ref_a)
    assert jnp.allclose(loss_b, ref_b, rtol=1e-5, atol=1e-6), (loss_b, ref_b)
    assert jnp.allclose(loss_c, ref_c, rtol=1e-4, atol=1e-6), (loss_c, ref_c)
    assert jnp.allclose(loss_d, ref_a, rtol=1e-6, atol=1e-7), (loss_d, ref_a)

    print("KERNEL_OK")
</pallas_src>

<mosaic_0001>
module attributes {stable_mosaic.version = 11 : i64} {
  func.func @_bce_mean_kernel(%arg0: i32, %arg1: i32, %arg2: memref<2x512xf32, #tpu.memory_space<vmem>>, %arg3: memref<2x512xf32, #tpu.memory_space<vmem>>, %arg4: memref<1x8x128xf32, #tpu.memory_space<vmem>>, %arg5: memref<2x512xf32, #tpu.memory_space<vmem>>) attributes {dimension_semantics = [#tpu.dimension_semantics<parallel>, #tpu.dimension_semantics<arbitrary>], iteration_bounds = array<i64: 1, 1>, scalar_prefetch = 0 : i64, scratch_operands = 1 : i64, tpu.core_type = #tpu.core_type<tc>, window_params = [{transform_indices = @transform_0, window_bounds = array<i64: 2, 512>}, {transform_indices = @transform_1, window_bounds = array<i64: 2, 512>}, {transform_indices = @transform_2, window_bounds = array<i64: 1, 8, 128>}]} {
    %c1_i32 = arith.constant 1 : i32
    %0 = arith.muli %arg0, %c1_i32 : i32
    %1 = arith.addi %0, %arg1 : i32
    %c0_i32 = arith.constant 0 : i32
    %2 = arith.cmpi eq, %arg1, %c0_i32 : i32
    %3 = arith.extui %2 : i1 to i32
    %c0_i32_0 = arith.constant 0 : i32
    %4 = arith.cmpi ne, %3, %c0_i32_0 : i32
    scf.if %4 {
      %cst_11 = arith.constant 0.000000e+00 : f32
      %28 = vector.broadcast %cst_11 : f32 to vector<2x512xf32>
      %c0_12 = arith.constant 0 : index
      %c0_13 = arith.constant 0 : index
      %29 = vector.load %arg5[%c0_12, %c0_13] : memref<2x512xf32, #tpu.memory_space<vmem>>, vector<2x512xf32>
      tpu.vector_store %arg5[%c0_12, %c0_13], %28 {strides = array<i32>} : memref<2x512xf32, #tpu.memory_space<vmem>>, vector<2x512xf32>,
    } else {
    }
    %c0 = arith.constant 0 : index
    %c0_1 = arith.constant 0 : index
    %5 = vector.load %arg2[%c0, %c0_1] : memref<2x512xf32, #tpu.memory_space<vmem>>, vector<2x512xf32>
    %c0_2 = arith.constant 0 : index
    %c0_3 = arith.constant 0 : index
    %6 = vector.load %arg3[%c0_2, %c0_3] : memref<2x512xf32, #tpu.memory_space<vmem>>, vector<2x512xf32>
    %cst = arith.constant 0.000000e+00 : f32
    %7 = vector.broadcast %cst : f32 to vector<2x512xf32>
    %8 = arith.maximumf %5, %7 : vector<2x512xf32>
    %9 = arith.mulf %5, %6 : vector<2x512xf32>
    %10 = arith.subf %8, %9 : vector<2x512xf32>
    %11 = math.absf %5 : vector<2x512xf32>
    %cst_4 = arith.constant 0.000000e+00 : f32
    %12 = vector.broadcast %cst_4 : f32 to vector<2x512xf32>
    %13 = arith.subf %12, %11 : vector<2x512xf32>
    %14 = math.exp %13 : vector<2x512xf32>
    %15 = math.log1p %14 : vector<2x512xf32>
    %16 = arith.addf %10, %15 : vector<2x512xf32>
    %c1_i32_5 = arith.constant 1 : i32
    %17 = arith.addi %1, %c1_i32_5 : i32
    %c2_i32 = arith.constant 2 : i32
    %18 = arith.muli %17, %c2_i32 : i32
    %c2_i32_6 = arith.constant 2 : i32
    %19 = arith.cmpi sle, %18, %c2_i32_6 : i32
    %20 = arith.extui %19 : i1 to i32
    %c0_i32_7 = arith.constant 0 : i32
    %21 = arith.cmpi ne, %20, %c0_i32_7 : i32
    scf.if %21 {
      %c0_11 = arith.constant 0 : index
      %c0_12 = arith.constant 0 : index
      %28 = vector.load %arg5[%c0_11, %c0_12] : memref<2x512xf32, #tpu.memory_space<vmem>>, vector<2x512xf32>
      %29 = arith.addf %28, %16 : vector<2x512xf32>
      %c0_13 = arith.constant 0 : index
      %c0_14 = arith.constant 0 : index
      %30 = vector.load %arg5[%c0_13, %c0_14] : memref<2x512xf32, #tpu.memory_space<vmem>>, vector<2x512xf32>
      tpu.vector_store %arg5[%c0_13, %c0_14], %29 {strides = array<i32>} : memref<2x512xf32, #tpu.memory_space<vmem>>, vector<2x512xf32>,
    } else {
    }
    %true = arith.constant true
    %22 = arith.xori %19, %true : i1
    %23 = arith.extui %22 : i1 to i32
    %c0_i32_8 = arith.constant 0 : i32
    %24 = arith.cmpi ne, %23, %c0_i32_8 : i32
    scf.if %24 {
      %c2_i32_11 = arith.constant 2 : i32
      %28 = arith.muli %1, %c2_i32_11 : i32
      %29 = tpu.iota {dimensions = array<i32: 0>} : vector<2x512xi32>
      %30 = vector.broadcast %28 : i32 to vector<2x512xi32>
      %31 = arith.addi %30, %29 : vector<2x512xi32>
      %c2_i32_12 = arith.constant 2 : i32
      %32 = vector.broadcast %c2_i32_12 : i32 to vector<2x512xi32>
      %33 = arith.cmpi slt, %31, %32 : vector<2x512xi32>
      %cst_13 = arith.constant 0.000000e+00 : f32
      %34 = vector.broadcast %cst_13 : f32 to vector<2x512xf32>
      %35 = arith.select %33, %16, %34 : vector<2x512xi1>, vector<2x512xf32>
      %c0_14 = arith.constant 0 : index
      %c0_15 = arith.constant 0 : index
      %36 = vector.load %arg5[%c0_14, %c0_15] : memref<2x512xf32, #tpu.memory_space<vmem>>, vector<2x512xf32>
      %37 = arith.addf %36, %35 : vector<2x512xf32>
      %c0_16 = arith.constant 0 : index
      %c0_17 = arith.constant 0 : index
      %38 = vector.load %arg5[%c0_16, %c0_17] : memref<2x512xf32, #tpu.memory_space<vmem>>, vector<2x512xf32>
      tpu.vector_store %arg5[%c0_16, %c0_17], %37 {strides = array<i32>} : memref<2x512xf32, #tpu.memory_space<vmem>>, vector<2x512xf32>,
    } else {
    }
    %c0_i32_9 = arith.constant 0 : i32
    %25 = arith.cmpi eq, %arg1, %c0_i32_9 : i32
    %26 = arith.extui %25 : i1 to i32
    %c0_i32_10 = arith.constant 0 : i32
    %27 = arith.cmpi ne, %26, %c0_i32_10 : i32
    scf.if %27 {
      %c0_11 = arith.constant 0 : index
      %c0_12 = arith.constant 0 : index
      %28 = vector.load %arg5[%c0_11, %c0_12] : memref<2x512xf32, #tpu.memory_space<vmem>>, vector<2x512xf32>
      %29 = vector.shape_cast %28 : vector<2x512xf32> to vector<1x2x512xf32>
      %cst_13 = arith.constant dense<0.000000e+00> : vector<1xf32>
      %30 = vector.multi_reduction <add>, %29, %cst_13 [1, 2] : vector<1x2x512xf32> to vector<1xf32>
      %31 = vector.shape_cast %30 : vector<1xf32> to vector<1x1x1xf32>
      %32 = vector.extract %31[0, 0, 0] : f32 from vector<1x1x1xf32>
      %cst_14 = arith.constant 9.765625E-4 : f32
      %33 = arith.mulf %32, %cst_14 : f32
      %cst_15 = arith.constant 0.000000e+00 : f32
      %34 = vector.broadcast %cst_15 : f32 to vector<1x8x128xf32>
      %35 = vector.broadcast %33 : f32 to vector<1x8x128xf32>
      %36 = arith.addf %34, %35 : vector<1x8x128xf32>
      %c0_16 = arith.constant 0 : index
      %c0_17 = arith.constant 0 : index
      %c0_18 = arith.constant 0 : index
      %37 = vector.load %arg4[%c0_16, %c0_17, %c0_18] : memref<1x8x128xf32, #tpu.memory_space<vmem>>, vector<1x8x128xf32>
      tpu.vector_store %arg4[%c0_16, %c0_17, %c0_18], %36 {strides = array<i32>} : memref<1x8x128xf32, #tpu.memory_space<vmem>>, vector<1x8x128xf32>,
    } else {
    }
    return
  }
  func.func @transform_0(%arg0: i32, %arg1: i32) -> (i32, i32) {
    %c1_i32 = arith.constant 1 : i32
    %0 = arith.muli %arg0, %c1_i32 : i32
    %1 = arith.addi %0, %arg1 : i32
    %c0_i32 = arith.constant 0 : i32
    %2 = arith.minsi %1, %c0_i32 : i32
    %c0_i32_0 = arith.constant 0 : i32
    %c0_i32_1 = arith.constant 0 : i32
    return %2, %c0_i32_0 : i32, i32
  }
  func.func @transform_1(%arg0: i32, %arg1: i32) -> (i32, i32) {
    %c1_i32 = arith.constant 1 : i32
    %0 = arith.muli %arg0, %c1_i32 : i32
    %1 = arith.addi %0, %arg1 : i32
    %c0_i32 = arith.constant 0 : i32
    %2 = arith.minsi %1, %c0_i32 : i32
    %c0_i32_0 = arith.constant 0 : i32
    %c0_i32_1 = arith.constant 0 : i32
    return %2, %c0_i32_0 : i32, i32
  }
  func.func @transform_2(%arg0: i32, %arg1: i32) -> (i32, i32, i32) {
    %c0_i32 = arith.constant 0 : i32
    %c0_i32_0 = arith.constant 0 : i32
    %c0_i32_1 = arith.constant 0 : i32
    return %arg0, %c0_i32, %c0_i32_0 : i32, i32, i32
  }
}

</mosaic_0001>

<llo_original>
// kernel: tpu_custom_call.1
$region0: #{tpu_custom_call.1}
  #allocation0 [shape = 'u32[]', space=smem, size = 0x4, offset = 0x4, fixed_abs, tag = 'smem constant byte address 0x4 - core index']
  #allocation1 [shape = 'u32[144,128]{1,0:T(1,128)}', space=vmem, size = 0x12000, scoped, tag = 'internal scratch']
  #allocation2 [shape = 'f32[2,512]{1,0:T(2,128)}', space=vmem, size = 0x1000, scoped, tag = 'scratch operand']
  %s0 = inlined_call_operand.hbm [shape: f32[2,512], index: 0, kind: input, shape index: {}]
  %s1 = inlined_call_operand.hbm [shape: f32[2,512], index: 1, kind: input, shape index: {}]
  %s2 = inlined_call_operand.hbm [shape: f32[1,8,128], index: 2, kind: output, shape index: {}]
  %s3 = sld [smem:[#allocation0]]
  $region42: #{tpu_custom_call.1} parent=0
    _
  %s5 = ssub.s32 1, %s3
  %s6 = scalar_select 0, %s5, %s3
  $region1: #{tpu_custom_call.1} parent=0
    #allocation3 [shape = 'u8[4096]{0}', space=vmem, size = 0x1000, scoped, tag = 'input window, operand 0, single buffered']
    #allocation4 [shape = 's32[1]{0}', space=sflag, size = 0x4, scoped, tag = 'scoped memory for tpu_custom_call.1']
    #allocation5 [shape = 's32[1]{0}', space=sflag, size = 0x4, scoped, tag = 'scoped memory for tpu_custom_call.1']
    #allocation6 [shape = 'u8[4096]{0}', space=vmem, size = 0x1000, scoped, tag = 'input window, operand 1, single buffered']
    #allocation7 [shape = 's32[1]{0}', space=sflag, size = 0x4, scoped, tag = 'scoped memory for tpu_custom_call.1']
    #allocation8 [shape = 'u8[4096]{0}', space=vmem, size = 0x1000, scoped, tag = 'output window, operand 0, single buffered']
    %7 = vsyncpa [#allocation4], 0
    %8 = vsyncpa [#allocation7], 0
    %9 = vsyncpa [#allocation5], 0
    // Predicated region
    $region2: #{tpu_custom_call.1} parent=1 // pred_check
      _
    $region3: #{tpu_custom_call.1} parent=1 // pred_check_branch
      %11 = sbr.rel (0) target = $region5
    $region4: #{tpu_custom_call.1} parent=1 // pred_region
      %s12 = sadd.s32 0, 0
      %p13 = scmp.lt.s32.totalorder %s12, 0
      %s14 = scalar_select %p13, %s12, 0
      %s16 = ssub.s32 128, 128
      %17 = vsyncadd [#allocation4], %s16
      %s18 = smul.addr %s14, 4
      %s19 = smul.addr %s18, 32
      %s20 = scalar_lea.hbm %s0, %s19
      %s22 = sshll.u32 [#allocation3], 4
      %s23 = int_to_ptr.vmem [resolvable:$true] %s22
      %25 = dma.hbm_to_vmem [thread:$0]  %s20, 128, %s23, [#allocation4]
    $region5: #{tpu_custom_call.1} parent=1 // pred_fallthru
      _
    // Predicated region
    $region6: #{tpu_custom_call.1} parent=1 // pred_check
      _
    $region7: #{tpu_custom_call.1} parent=1 // pred_check_branch
      %27 = sbr.rel (0) target = $region9
    $region8: #{tpu_custom_call.1} parent=1 // pred_region
      %s28 = sadd.s32 0, 0
      %p29 = scmp.lt.s32.totalorder %s28, 0
      %s30 = scalar_select %p29, %s28, 0
      %s32 = ssub.s32 128, 128
      %33 = vsyncadd [#allocation7], %s32
      %s34 = smul.addr %s30, 4
      %s35 = smul.addr %s34, 32
      %s36 = scalar_lea.hbm %s1, %s35
      %s38 = sshll.u32 [#allocation6], 4
      %s39 = int_to_ptr.vmem [resolvable:$true] %s38
      %41 = dma.hbm_to_vmem [thread:$0]  %s36, 128, %s39, [#allocation7]
    $region9: #{tpu_custom_call.1} parent=1 // pred_fallthru
      _
    // Predicated region
    $region10: #{tpu_custom_call.1} parent=1 // pred_check
      _
    $region11: #{tpu_custom_call.1} parent=1 // pred_check_branch
      %43 = sbr.rel (0) target = $region13
    $region12: #{tpu_custom_call.1} parent=1 // pred_region
      %44 = dma.done [#allocation4], 128
    $region13: #{tpu_custom_call.1} parent=1 // pred_fallthru
      _
    // Predicated region
    $region14: #{tpu_custom_call.1} parent=1 // pred_check
      _
    $region15: #{tpu_custom_call.1} parent=1 // pred_check_branch
      %46 = sbr.rel (0) target = $region17
    $region16: #{tpu_custom_call.1} parent=1 // pred_region
      %47 = dma.done [#allocation7], 128
    $region17: #{tpu_custom_call.1} parent=1 // pred_fallthru
      _
    %s48 = sadd.s32 0, 0
    %p49 = scmp.lt.s32.totalorder %s48, 0
    %s50 = scalar_select %p49, %s48, 0
    %s51 = sadd.s32 0, 0
    %p52 = scmp.lt.s32.totalorder %s51, 0
    %s53 = scalar_select %p52, %s51, 0
    %s54 = sadd.s32 0, 0
    %p55 = scmp.eq.s32.totalorder 0, 0
    // Predicated region
    $region18: #{tpu_custom_call.1} parent=1 // pred_check
      %p56 = pneg %p55
    $region19: #{tpu_custom_call.1} parent=1 // pred_check_branch
      %58 = sbr.rel (%p56) target = $region21
    $region20: #{tpu_custom_call.1} parent=1 // pred_region
      %59 = vst [vmem:[#allocation2] sm:$0xff] 0.0
    $region21: #{tpu_custom_call.1} parent=1 // pred_fallthru
      _
    %v60 = vld [vmem:[#allocation3] sm:$0xff]
    %v61 = vld [vmem:[#allocation6] sm:$0xff]
    %v62 = vmax.f32 %v60, 0.0
    %v63 = vmul.f32 %v60, %v61
    %v64 = vsub.f32 %v62, %v63
    %v65 = vand.u32 2147483647, %v60
    %v66 = vsub.f32 0.0, %v65
    %v67 = vmul.f32 %v66, 1.442695
    %v68 = vpow.pop %v67
    %v69 = vadd.f32 %v68, 1.0
    %v70 = vlog2.pop %v69
    %v71 = vmul.f32 %v70, 0.6931472
    %v72 = vmul.f32 -0.5, %v68
    %v73 = vadd.f32 %v72, 1.0
    %v74 = vmul.f32 %v73, %v68
    %v75 = vand.u32 2147483647, %v68
    %vm76 = vcmp.lt.f32.partialorder %v75, 0.0004427343
    %v77 = vsel %vm76, %v74, %v71
    %v78 = vadd.f32 %v64, %v77
    %s79 = sadd.s32 %s54, 1
    %s80 = smul.u32 %s79, 2
    %p81 = scmp.le.s32.totalorder %s80, 2
    // Predicated region
    $region22: #{tpu_custom_call.1} parent=1 // pred_check
      %p82 = pneg %p81
    $region23: #{tpu_custom_call.1} parent=1 // pred_check_branch
      %84 = sbr.rel (%p82) target = $region25
    $region24: #{tpu_custom_call.1} parent=1 // pred_region
      %v85 = vld [vmem:[#allocation2] sm:$0xff]
      %v86 = vadd.f32 %v85, %v78
      %87 = vst [vmem:[#allocation2] sm:$0xff] %v86
    $region25: #{tpu_custom_call.1} parent=1 // pred_fallthru
      _
    %p88 = scmp.gt.s32.totalorder %s80, 2
    // Predicated region
    $region26: #{tpu_custom_call.1} parent=1 // pred_check
      %p89 = pneg %p88
    $region27: #{tpu_custom_call.1} parent=1 // pred_check_branch
      %91 = sbr.rel (%p89) target = $region29
    $region28: #{tpu_custom_call.1} parent=1 // pred_region
      %s92 = smul.u32 %s54, 2
      %v93 = vlaneseq
      %v94 = vshrl.u32 %v93, 7
      %v95 = vstv %s92
      %v96 = vadd.s32 %v95, %v94
      %vm97 = vcmp.lt.s32.totalorder %v96, 2
      %v99 = vcombine.high %v78, %v78
      %v101 = vunpack.c.l.s4 1983009808
      %v102 = vunpack.c.0.s8 %v101
      %v103 = vlaneseq
      %v104 = vshrl.u32 %v103, 7
      %v105 = vsub.s32 %v102, %v104
      %v106 = vrot.slane %v78, %v105
      %v108 = vunpack.c.l.s4 1983009808
      %v109 = vunpack.c.0.s8 %v108
      %v110 = vlaneseq
      %v111 = vshrl.u32 %v110, 7
      %v112 = vsub.s32 %v109, %v111
      %v113 = vrot.slane %v99, %v112
      %v114 = vcombine.high %v106, %v106
      %v115 = vcombine.high %v113, %v113
      %v120 = vsel %vm97, %v106, 0.0
      %v121 = vsel %vm97, %v114, 0.0
      %v122 = vsel %vm97, %v113, 0.0
      %v123 = vsel %vm97, %v115, 0.0
      %v124 = vld [vmem:[#allocation2] sm:$0xff]
      %v129 = vcombine.low %v120, %v121
      %v130 = vcombine.low %v122, %v123
      %v132 = vunpack.c.l.s4 1983009808
      %v133 = vunpack.c.0.s8 %v132
      %v134 = vlaneseq
      %v135 = vshrl.u32 %v134, 7
      %v136 = vsub.s32 %v133, %v135
      %v137 = vrot.slane %v129, %v136
      %v139 = vunpack.c.l.s4 1983009808
      %v140 = vunpack.c.0.s8 %v139
      %v141 = vlaneseq
      %v142 = vshrl.u32 %v141, 7
      %v143 = vsub.s32 %v140, %v142
      %v144 = vrot.slane %v130, %v143
      %v145 = vcombine.low %v137, %v144
      %v147 = vadd.f32 %v124, %v145
      %148 = vst [vmem:[#allocation2] sm:$0xff] %v147
    $region29: #{tpu_custom_call.1} parent=1 // pred_fallthru
      _
    // Predicated region
    $region30: #{tpu_custom_call.1} parent=1 // pred_check
      %p149 = pneg %p55
    $region31: #{tpu_custom_call.1} parent=1 // pred_check_branch
      %151 = sbr.rel (%p149) target = $region33
    $region32: #{tpu_custom_call.1} parent=1 // pred_region
      %v152 = vld [vmem:[#allocation2] sm:$0xff]
      %v154 = vcombine.high %v152, %v152
      %v156 = vunpack.c.l.s4 1983009808
      %v157 = vunpack.c.0.s8 %v156
      %v158 = vlaneseq
      %v159 = vshrl.u32 %v158, 7
      %v160 = vsub.s32 %v157, %v159
      %v161 = vrot.slane %v152, %v160
      %v163 = vunpack.c.l.s4 1983009808
      %v164 = vunpack.c.0.s8 %v163
      %v165 = vlaneseq
      %v166 = vshrl.u32 %v165, 7
      %v167 = vsub.s32 %v164, %v166
      %v168 = vrot.slane %v154, %v167
      %v169 = vcombine.high %v161, %v161
      %v170 = vcombine.high %v168, %v168
      %vm175 = vcmask 1041408
      %v176 = vsel %vm175, %v161, 0.0
      %v177 = vsel %vm175, %v169, 0.0
      %v178 = vadd.f32 %v176, %v177
      %v179 = vsel %vm175, %v168, 0.0
      %v180 = vadd.f32 %v178, %v179
      %v181 = vsel %vm175, %v170, 0.0
      %v182 = vadd.f32 %v180, %v181
      %183 = vadd.xlane.f32.xlu0 %v182
      %v184 = vpop.xlane.xlu0 %183
      %v185 = vrot.slane %v184, 4
      %v186 = vadd.f32 %v184, %v185
      %v187 = vrot.slane %v186, 2
      %v188 = vadd.f32 %v186, %v187
      %v189 = vrot.slane %v188, 1
      %v190 = vadd.f32 %v188, %v189
      %s191 = vtos %v190
      %s192 = smul.f32 %s191, 0.0009765625
      %v193 = vstv %s192
      %v194 = vadd.f32 %v193, 0.0
      %195 = vst [vmem:[#allocation8] sm:$0xff] %v194
    $region33: #{tpu_custom_call.1} parent=1 // pred_fallthru
      _
    // Predicated region
    $region34: #{tpu_custom_call.1} parent=1 // pred_check
      _
    $region35: #{tpu_custom_call.1} parent=1 // pred_check_branch
      %197 = sbr.rel (0) target = $region37
    $region36: #{tpu_custom_call.1} parent=1 // pred_region
      %s199 = ssub.s32 128, 128
      %200 = vsyncadd [#allocation5], %s199
      %s202 = sshll.u32 [#allocation8], 4
      %s203 = int_to_ptr.vmem [resolvable:$true] %s202
      %205 = dma.vmem_to_hbm [thread:$0]  %s203, 128, %s2, [#allocation5]
    $region37: #{tpu_custom_call.1} parent=1 // pred_fallthru
      _
    // Predicated region
    $region38: #{tpu_custom_call.1} parent=1 // pred_check
      _
    $region39: #{tpu_custom_call.1} parent=1 // pred_check_branch
      %207 = sbr.rel (0) target = $region41
    $region40: #{tpu_custom_call.1} parent=1 // pred_region
      %208 = dma.done [#allocation5], 128
    $region41: #{tpu_custom_call.1} parent=1 // pred_fallthru
      _
    %209 = vsyncpa [#allocation4], 1
    %210 = vsyncpa [#allocation7], 1
    %211 = vsyncpa [#allocation5], 1

</llo_original>
